<compile_context>
chip_gen: v5e
topology: v5e:2x2
jax: 0.10.0
libtpu: 0.0.40
codegen_flags: <defaults>
</compile_context>

<pallas_src>
import jax
import jax.numpy as jnp
from jax.experimental import pallas as pl
from jax.experimental.pallas import tpu as pltpu

PRED_LEN = 12               # fixed by the module's `repeat(1, 12, 1)`
_DEFAULT_ROW_TILE = 16384   # batch rows per grid step (multiple of 8); ~1.8 MB/step for D=2
_PALLAS_MIN_ROWS = 1024     # below this the fused XLA fallback beats the custom-call launch


def _round_up(x: int, m: int) -> int:
    return ((x + m - 1) // m) * m


def _cvm_kernel(pair_ref, out_ref):
    # pair_ref: (tb, 2*D)        row-major view of (tb, 2, D):  [obs[T-2,:], obs[T-1,:]]
    # out_ref : (tb, PRED_LEN*D) row-major view of (tb, 12, D)
    x = pair_ref[...]                            # one contiguous block load
    d = x.shape[-1] // 2
    delta = x[:, d:] - x[:, :d]                  # (tb, D) constant velocity
    # out[:, t*D + j] = delta[:, j] for all t -> repeat the D-wide slab PRED_LEN times.
    out_ref[...] = jnp.concatenate([delta] * PRED_LEN, axis=-1)


def _choose_row_tile(b_rows: int, row_tile: int) -> int:
    """Pick a sublane tile (multiple of 8) aiming for >=2 grid steps."""
    row_tile = max(8, (row_tile // 8) * 8)
    if b_rows <= 8:
        return 8
    # >=2 steps: lets "parallel" shard across v7x's 2 TensorCores and gives the
    # BlockSpec pipeline something to overlap on v5e/v6e.
    half = _round_up(pl.cdiv(b_rows, 2), 8)
    return min(row_tile, half)


def constant_velocity_model(observed: jax.Array, *, use_pallas=None,
                            row_tile: int = _DEFAULT_ROW_TILE) -> jax.Array:
    """observed: (B, T, D) -> y_pred_rel: (B, PRED_LEN, D), same dtype."""
    B, T, D = observed.shape
    assert T >= 2, "need at least two observed timesteps"
    if use_pallas is None:
        use_pallas = B >= _PALLAS_MIN_ROWS
    if not use_pallas:
        # Tiny problem: a single fused XLA broadcast is strictly faster than any launch.
        delta = observed[:, T - 1, :] - observed[:, T - 2, :]
        return jnp.broadcast_to(delta[:, None, :], (B, PRED_LEN, D))

    # Only the last two timesteps are needed; (B, 2, D) -> (B, 2*D) is a free reshape.
    pair = observed[:, T - 2:T, :].reshape(B, 2 * D)

    tb = _choose_row_tile(_round_up(B, 8), row_tile)
    b_pad = _round_up(B, tb)                     # pad batch rows instead of shrinking tiles
    if b_pad != B:
        pair = jnp.pad(pair, ((0, b_pad - B), (0, 0)))
    grid = (b_pad // tb,)

    n = b_pad * D
    itemsize = jnp.dtype(observed.dtype).itemsize
    cost = pl.CostEstimate(flops=n, transcendentals=0,
                           bytes_accessed=(2 + PRED_LEN) * n * itemsize)

    out2d = pl.pallas_call(
        _cvm_kernel,
        out_shape=jax.ShapeDtypeStruct((b_pad, PRED_LEN * D), observed.dtype),
        grid_spec=pltpu.PrefetchScalarGridSpec(
            num_scalar_prefetch=0,
            grid=grid,
            in_specs=[pl.BlockSpec((tb, 2 * D), lambda i: (i, 0))],
            out_specs=pl.BlockSpec((tb, PRED_LEN * D), lambda i: (i, 0)),
        ),
        compiler_params=pltpu.CompilerParams(
            dimension_semantics=("parallel",)),
        cost_estimate=cost,
    )(pair)

    if b_pad != B:
        out2d = out2d[:B]
    # Row-major identical layout -> free reshape, no transpose.
    return out2d.reshape(B, PRED_LEN, D)


def _reference(observed: jnp.ndarray) -> jnp.ndarray:
    obs_rel = observed[:, 1:] - observed[:, :-1]
    deltas = obs_rel[:, -1][:, None, :]
    return jnp.tile(deltas, (1, PRED_LEN, 1))


if __name__ == "__main__":
    key = jax.random.PRNGKey(0)

    # 1) Small shape matching the module's usage: 2 trajectories, 8 observed steps, (x, y).
    B, T, D = 2, 8, 2
    observed = jax.random.normal(key, (B, T, D), dtype=jnp.float32)
    expected = _reference(observed)
    y_pred_rel = jax.block_until_ready(constant_velocity_model(observed, use_pallas=True))
    assert y_pred_rel.shape == (B, PRED_LEN, D)
    assert y_pred_rel.dtype == observed.dtype
    assert jnp.allclose(y_pred_rel, expected, atol=1e-6), "pallas path mismatch"

    # 2) Default path at this tiny size uses the fused XLA fallback (perf guard).
    y_auto = jax.block_until_ready(constant_velocity_model(observed))
    assert jnp.allclose(y_auto, expected, atol=1e-6), "fallback path mismatch"

    # 3) Larger batch: 2-step "parallel" grid (tb=256), no padding.
    k2 = jax.random.PRNGKey(0)
    B2, T2, D2 = 512, 10, 2
    observed2 = jax.random.normal(k2, (B2, T2, D2), dtype=jnp.float32)
    y2 = jax.block_until_ready(constant_velocity_model(observed2, use_pallas=True))
    assert y2.shape == (B2, PRED_LEN, D2)
    assert jnp.allclose(y2, _reference(observed2), atol=1e-6), "gridded path mismatch"

    # 4) Non-multiple-of-8 batch exercises the pad-and-slice path.
    k3 = jax.random.PRNGKey(0)
    B3 = 100
    observed3 = jax.random.normal(k3, (B3, 6, 2), dtype=jnp.float32)
    y3 = jax.block_until_ready(constant_velocity_model(observed3, use_pallas=True))
    assert y3.shape == (B3, PRED_LEN, 2)
    assert jnp.allclose(y3, _reference(observed3), atol=1e-6), "padded path mismatch"

    print("KERNEL_OK")
</pallas_src>

<mosaic_0001>
module attributes {stable_mosaic.version = 11 : i64} {
  func.func @_cvm_kernel(%arg0: i32, %arg1: memref<8x4xf32, #tpu.memory_space<vmem>>, %arg2: memref<8x24xf32, #tpu.memory_space<vmem>>) attributes {dimension_semantics = [#tpu.dimension_semantics<parallel>], iteration_bounds = array<i64: 1>, scalar_prefetch = 0 : i64, scratch_operands = 0 : i64, tpu.core_type = #tpu.core_type<tc>, window_params = [{transform_indices = @transform_0, window_bounds = array<i64: 8, 4>}, {transform_indices = @transform_1, window_bounds = array<i64: 8, 24>}]} {
    %c0 = arith.constant 0 : index
    %c0_0 = arith.constant 0 : index
    %0 = vector.load %arg1[%c0, %c0_0] : memref<8x4xf32, #tpu.memory_space<vmem>>, vector<8x4xf32>
    %1 = vector.extract_strided_slice %0 {offsets = [0, 2], sizes = [8, 2], strides = [1, 1]} : vector<8x4xf32> to vector<8x2xf32>
    %2 = vector.extract_strided_slice %0 {offsets = [0, 0], sizes = [8, 2], strides = [1, 1]} : vector<8x4xf32> to vector<8x2xf32>
    %3 = arith.subf %1, %2 : vector<8x2xf32>
    %4 = tpu.concatenate %3, %3, %3, %3, %3, %3, %3, %3, %3, %3, %3, %3 in 1 : vector<8x2xf32>, vector<8x2xf32>, vector<8x2xf32>, vector<8x2xf32>, vector<8x2xf32>, vector<8x2xf32>, vector<8x2xf32>, vector<8x2xf32>, vector<8x2xf32>, vector<8x2xf32>, vector<8x2xf32>, vector<8x2xf32> -> vector<8x24xf32>
    %c0_1 = arith.constant 0 : index
    %c0_2 = arith.constant 0 : index
    %5 = vector.load %arg2[%c0_1, %c0_2] : memref<8x24xf32, #tpu.memory_space<vmem>>, vector<8x24xf32>
    tpu.vector_store %arg2[%c0_1, %c0_2], %4 {strides = array<i32>} : memref<8x24xf32, #tpu.memory_space<vmem>>, vector<8x24xf32>,
    return
  }
  func.func @transform_0(%arg0: i32) -> (i32, i32) {
    %c0_i32 = arith.constant 0 : i32
    %c0_i32_0 = arith.constant 0 : i32
    return %arg0, %c0_i32 : i32, i32
  }
  func.func @transform_1(%arg0: i32) -> (i32, i32) {
    %c0_i32 = arith.constant 0 : i32
    %c0_i32_0 = arith.constant 0 : i32
    return %arg0, %c0_i32 : i32, i32
  }
}

</mosaic_0001>

<llo_original>
// kernel: tpu_custom_call.1
$region0: #{tpu_custom_call.1}
  #allocation0 [shape = 'u32[]', space=smem, size = 0x4, offset = 0x4, fixed_abs, tag = 'smem constant byte address 0x4 - core index']
  #allocation1 [shape = 'u32[72,128]{1,0:T(1,128)}', space=vmem, size = 0x9000, scoped, tag = 'internal scratch']
  %s0 = inlined_call_operand.vmem [shape: f32[8,4], index: 0, kind: input, shape index: {}]
  %s1 = inlined_call_operand.hbm [shape: f32[8,24], index: 1, kind: output, shape index: {}]
  %s2 = sld [smem:[#allocation0]]
  $region14: #{tpu_custom_call.1} parent=0
    _
  %s4 = ssub.s32 1, %s2
  %s5 = scalar_select 0, %s4, %s2
  $region1: #{tpu_custom_call.1} parent=0
    #allocation2 [shape = 'u8[4096]{0}', space=vmem, size = 0x1000, scoped, tag = 'output window, operand 0, single buffered']
    #allocation3 [shape = 's32[1]{0}', space=sflag, size = 0x4, scoped, tag = 'scoped memory for tpu_custom_call.1']
    %6 = vsyncpa [#allocation3], 0
    // Predicated region
    $region2: #{tpu_custom_call.1} parent=1 // pred_check
      _
    $region3: #{tpu_custom_call.1} parent=1 // pred_check_branch
      %8 = sbr.rel (0) target = $region5
    $region4: #{tpu_custom_call.1} parent=1 // pred_region
      _
    $region5: #{tpu_custom_call.1} parent=1 // pred_fallthru
      _
    %v9 = vld [vmem:[%s0] sm:$0xff]
    %11 = vrot.lane.b32.xlu0 %v9, 2
    %v12 = vpop.permute.xlu0 %11
    %v14 = vsub.f32 %v9, %v12
    %16 = vrot.lane.b32.xlu0 %v14, 126
    %v17 = vpop.permute.xlu0 %16
    %19 = vrot.lane.b32.xlu0 %v14, 2
    %v20 = vpop.permute.xlu0 %19
    %22 = vrot.lane.b32.xlu0 %v14, 4
    %v23 = vpop.permute.xlu0 %22
    %25 = vrot.lane.b32.xlu0 %v14, 6
    %v26 = vpop.permute.xlu0 %25
    %28 = vrot.lane.b32.xlu0 %v14, 8
    %v29 = vpop.permute.xlu0 %28
    %31 = vrot.lane.b32.xlu0 %v14, 10
    %v32 = vpop.permute.xlu0 %31
    %34 = vrot.lane.b32.xlu0 %v14, 12
    %v35 = vpop.permute.xlu0 %34
    %37 = vrot.lane.b32.xlu0 %v14, 14
    %v38 = vpop.permute.xlu0 %37
    %40 = vrot.lane.b32.xlu0 %v14, 16
    %v41 = vpop.permute.xlu0 %40
    %43 = vrot.lane.b32.xlu0 %v14, 18
    %v44 = vpop.permute.xlu0 %43
    %46 = vrot.lane.b32.xlu0 %v14, 20
    %v47 = vpop.permute.xlu0 %46
    %vm49 = vcmask 15360
    %v50 = vsel %vm49, %v17, %v14
    %vm51 = vcmask 31744
    %v52 = vsel %vm51, %v50, %v20
    %vm53 = vcmask 48128
    %v54 = vsel %vm53, %v52, %v23
    %vm55 = vcmask 64512
    %v56 = vsel %vm55, %v54, %v26
    %vm57 = vcmask 80896
    %v58 = vsel %vm57, %v56, %v29
    %vm59 = vcmask 97280
    %v60 = vsel %vm59, %v58, %v32
    %vm61 = vcmask 113664
    %v62 = vsel %vm61, %v60, %v35
    %vm63 = vcmask 130048
    %v64 = vsel %vm63, %v62, %v38
    %vm65 = vcmask 146432
    %v66 = vsel %vm65, %v64, %v41
    %vm67 = vcmask 162816
    %v68 = vsel %vm67, %v66, %v44
    %vm69 = vcmask 179200
    %v70 = vsel %vm69, %v68, %v47
    %vm71 = vcmask 195584
    %72 = vst.msk [vmem:[#allocation2] sm:$0xff] %vm71, %v70
    // Predicated region
    $region6: #{tpu_custom_call.1} parent=1 // pred_check
      _
    $region7: #{tpu_custom_call.1} parent=1 // pred_check_branch
      %74 = sbr.rel (0) target = $region9
    $region8: #{tpu_custom_call.1} parent=1 // pred_region
      %76 = vsyncadd [#allocation3], 0
      %s78 = sshll.u32 [#allocation2], 4
      %s79 = int_to_ptr.vmem [resolvable:$true] %s78
      %s80 = sshll.u32 %s1, 4
      %s81 = int_to_ptr.hbm [resolvable:$true] %s80
      %83 = dma.vmem_to_hbm [thread:$0]  %s79, 128, %s81, [#allocation3]
    $region9: #{tpu_custom_call.1} parent=1 // pred_fallthru
      _
    // Predicated region
    $region10: #{tpu_custom_call.1} parent=1 // pred_check
      _
    $region11: #{tpu_custom_call.1} parent=1 // pred_check_branch
      %85 = sbr.rel (0) target = $region13
    $region12: #{tpu_custom_call.1} parent=1 // pred_region
      %87 = dma.done [#allocation3], 128
    $region13: #{tpu_custom_call.1} parent=1 // pred_fallthru
      _
    %88 = vsyncpa [#allocation3], 1

</llo_original>
